<compile_context>
chip_gen: v7x
topology: tpu7x:2x2x1
jax: 0.10.0
libtpu: 0.0.40
codegen_flags: <defaults>
</compile_context>

<pallas_src>
import jax
import jax.numpy as jnp
from jax.experimental import pallas as pl

BATCH = 2
SEQ_LEN = 8
NUM_VARS = 4      # N: number of input variables
INPUT_DIM = 16    # D: per-variable feature dim (GRN output_dim == input_dim -> skip = Identity)
HIDDEN = 32       # GRN / weight-network hidden dim
LN_EPS = 1e-5     # PyTorch nn.LayerNorm default eps

ND = NUM_VARS * INPUT_DIM      # 64
NH = NUM_VARS * HIDDEN         # 128
LANES = 128


def _round8(n):
    return (n + 7) // 8 * 8


# Row offsets of each constant inside the packed matrix slab (all multiples of 8).
OFF_W1 = 0                                   # [ND, NH]  block-diag GRN fc1
OFF_W2 = OFF_W1 + ND                         # [NH, ND]  block-diag GRN fc2
OFF_WG = OFF_W2 + NH                         # [ND, ND]  block-diag GRN gate linear
OFF_WN1 = OFF_WG + ND                        # [ND, H]   weight-network fc1
OFF_WN2 = OFF_WN1 + ND                       # [H, N]    weight-network fc2
OFF_MSEG = OFF_WN2 + HIDDEN                  # [ND, ND]  block-diag (1/D)*ones  (segment mean)
OFF_EXP = OFF_MSEG + ND                      # [N, ND]   expand weights across D lanes
OFF_SEG = OFF_EXP + _round8(NUM_VARS)        # [ND, 128] segment-sum -> lanes 0:D
OFF_PLC = OFF_SEG + ND                       # [N, 128]  place weight n at lane D+n
MAT_ROWS = OFF_PLC + _round8(NUM_VARS)       # 496


def vsn_kernel(xflat_ref, mat_ref, vec_ref, out_ref):
    """VariableSelectionNetwork forward for all M = B*T rows in one invocation.

    xflat_ref : [M, N*D]        flattened per-row inputs
    mat_ref   : [MAT_ROWS, 128] packed matrix constants (block-diag GRN weights etc.)
    vec_ref   : [8, 128]        packed bias / LayerNorm vectors
    out_ref   : [M, 128]        lanes 0:D weighted GRN output, lanes D:D+N softmax weights
    """
    N, D, H = NUM_VARS, INPUT_DIM, HIDDEN

    x = xflat_ref[...]                                                  # [M, ND]

    # ---- static views into the packed constant slabs ----------------------
    w1 = mat_ref[OFF_W1:OFF_W1 + ND, 0:NH]                              # [ND, NH]
    w2 = mat_ref[OFF_W2:OFF_W2 + NH, 0:ND]                              # [NH, ND]
    wg = mat_ref[OFF_WG:OFF_WG + ND, 0:ND]                              # [ND, ND]
    wn1 = mat_ref[OFF_WN1:OFF_WN1 + ND, 0:H]                            # [ND, H]
    wn2 = mat_ref[OFF_WN2:OFF_WN2 + H, 0:N]                             # [H, N]
    mseg = mat_ref[OFF_MSEG:OFF_MSEG + ND, 0:ND]                        # [ND, ND]
    expand = mat_ref[OFF_EXP:OFF_EXP + N, 0:ND]                         # [N, ND]
    segsum = mat_ref[OFF_SEG:OFF_SEG + ND, :]                           # [ND, 128]
    placer = mat_ref[OFF_PLC:OFF_PLC + N, :]                            # [N, 128]

    b1 = vec_ref[0:1, 0:NH]
    b2 = vec_ref[1:2, 0:ND]
    bg = vec_ref[2:3, 0:ND]
    gamma = vec_ref[3:4, 0:ND]
    beta = vec_ref[4:5, 0:ND]
    bn1 = vec_ref[5:6, 0:H]
    bn2 = vec_ref[6:7, 0:N]

    # ---- variable-selection weights: softmax(MLP(flattened input)) --------
    h = jnp.maximum(jnp.dot(x, wn1, preferred_element_type=jnp.float32) + bn1, 0.0)
    logits = jnp.dot(h, wn2, preferred_element_type=jnp.float32) + bn2  # [M, N]
    logits = logits - jnp.max(logits, axis=-1, keepdims=True)
    e = jnp.exp(logits)
    inv_den = pl.reciprocal(jnp.sum(e, axis=-1, keepdims=True), approx=True)
    weights = e * inv_den                                               # [M, N]

    # ---- all N GRNs as lane-dense 2-D matmuls on block-diag weights -------
    a = jnp.dot(x, w1, preferred_element_type=jnp.float32) + b1         # [M, NH]
    a = jnp.where(a > 0.0, a, jnp.exp(jnp.minimum(a, 0.0)) - 1.0)       # ELU (overflow-safe)
    f = jnp.dot(a, w2, preferred_element_type=jnp.float32) + b2         # [M, ND]
    z = jnp.dot(f, wg, preferred_element_type=jnp.float32) + bg         # [M, ND]
    r = jax.nn.sigmoid(z) * f + x                                       # gated + residual (skip = Identity)

    # LayerNorm per variable via block-diagonal segment-mean matmuls (lane-dense)
    mean = jnp.dot(r, mseg, preferred_element_type=jnp.float32)         # per-var mean, replicated
    diff = r - mean
    var = jnp.dot(diff * diff, mseg, preferred_element_type=jnp.float32)  # biased var (PyTorch LN)
    y = diff * jax.lax.rsqrt(var + LN_EPS) * gamma + beta               # [M, ND]

    # ---- weighted combination over variables (single MXU passes) ----------
    wrep = jnp.dot(weights, expand, preferred_element_type=jnp.float32)  # [M, ND]
    out = jnp.dot(wrep * y, segsum, preferred_element_type=jnp.float32)  # [M, 128] (lanes 0:D)
    out = out + jnp.dot(weights, placer, preferred_element_type=jnp.float32)  # weights -> lanes D:D+N
    out_ref[...] = out                                                   # one lane-dense store


def vsn_forward(x, packed):
    """x: [B, T, N, D] or [B, N, D] (PyTorch layouts). Returns (weighted, weights)."""
    if x.ndim == 4:
        B, T, N, D = x.shape
        M = B * T
    else:
        B, N, D = x.shape
        M = B
    xflat = x.reshape(M, N * D)

    out_full = pl.pallas_call(
        vsn_kernel,
        out_shape=jax.ShapeDtypeStruct((M, LANES), jnp.float32),
    )(xflat, packed["mats"], packed["vecs"])

    weighted = out_full[:, :D]
    weights = out_full[:, D:D + N]
    if x.ndim == 4:
        return weighted.reshape(B, T, D), weights.reshape(B, T, N)
    return weighted, weights[:, :, None]   # match PyTorch's unsqueeze(-1) in the 3-D branch


def init_params(key):
    ks = jax.random.split(key, 10)

    def rnd(k, shape, scale=0.05):
        return jax.random.normal(k, shape, dtype=jnp.float32) * scale

    return dict(
        # per-variable GRN weights, stored as [in, out]
        w1=rnd(ks[0], (NUM_VARS, INPUT_DIM, HIDDEN)),
        b1=rnd(ks[1], (NUM_VARS, 1, HIDDEN)),
        w2=rnd(ks[2], (NUM_VARS, HIDDEN, INPUT_DIM)),
        b2=rnd(ks[3], (NUM_VARS, 1, INPUT_DIM)),
        wg=rnd(ks[4], (NUM_VARS, INPUT_DIM, INPUT_DIM)),
        bg=rnd(ks[5], (NUM_VARS, 1, INPUT_DIM)),
        gamma=jnp.ones((NUM_VARS, 1, INPUT_DIM), jnp.float32),
        beta=jnp.zeros((NUM_VARS, 1, INPUT_DIM), jnp.float32),
        # weight network
        wn1=rnd(ks[6], (NUM_VARS * INPUT_DIM, HIDDEN)),
        bn1=rnd(ks[7], (1, HIDDEN)),
        wn2=rnd(ks[8], (HIDDEN, NUM_VARS)),
        bn2=rnd(ks[9], (1, NUM_VARS)),
    )


def pack_params(p):
    """Block-diagonalize GRN weights and pack all constants into two VMEM slabs."""
    N, D, H = NUM_VARS, INPUT_DIM, HIDDEN

    mats = jnp.zeros((MAT_ROWS, LANES), jnp.float32)
    for i in range(N):
        mats = mats.at[OFF_W1 + i * D: OFF_W1 + (i + 1) * D, i * H:(i + 1) * H].set(p["w1"][i])
        mats = mats.at[OFF_W2 + i * H: OFF_W2 + (i + 1) * H, i * D:(i + 1) * D].set(p["w2"][i])
        mats = mats.at[OFF_WG + i * D: OFF_WG + (i + 1) * D, i * D:(i + 1) * D].set(p["wg"][i])
        mats = mats.at[OFF_MSEG + i * D: OFF_MSEG + (i + 1) * D, i * D:(i + 1) * D].set(
            jnp.full((D, D), 1.0 / D, jnp.float32))
        mats = mats.at[OFF_EXP + i, i * D:(i + 1) * D].set(1.0)
        mats = mats.at[OFF_SEG + i * D: OFF_SEG + (i + 1) * D, 0:D].set(jnp.eye(D, dtype=jnp.float32))
        mats = mats.at[OFF_PLC + i, D + i].set(1.0)
    mats = mats.at[OFF_WN1:OFF_WN1 + N * D, 0:H].set(p["wn1"])
    mats = mats.at[OFF_WN2:OFF_WN2 + H, 0:N].set(p["wn2"])

    vecs = jnp.zeros((8, LANES), jnp.float32)
    vecs = vecs.at[0, 0:N * H].set(p["b1"].reshape(N * H))
    vecs = vecs.at[1, 0:N * D].set(p["b2"].reshape(N * D))
    vecs = vecs.at[2, 0:N * D].set(p["bg"].reshape(N * D))
    vecs = vecs.at[3, 0:N * D].set(p["gamma"].reshape(N * D))
    vecs = vecs.at[4, 0:N * D].set(p["beta"].reshape(N * D))
    vecs = vecs.at[5, 0:H].set(p["bn1"].reshape(H))
    vecs = vecs.at[6, 0:N].set(p["bn2"].reshape(N))
    return dict(mats=mats, vecs=vecs)


def vsn_reference(x, p):
    """Pure-JAX reference matching the PyTorch module (eval mode), 4-D input."""
    hp = jax.lax.Precision.HIGHEST
    B, T, N, D = x.shape
    xr = x.reshape(B * T, N, D)
    outs = []
    for i in range(N):
        xi = xr[:, i, :]
        a = jnp.dot(xi, p["w1"][i], precision=hp) + p["b1"][i, 0]
        a = jnp.where(a > 0.0, a, jnp.exp(jnp.minimum(a, 0.0)) - 1.0)
        f = jnp.dot(a, p["w2"][i], precision=hp) + p["b2"][i, 0]
        z = jnp.dot(f, p["wg"][i], precision=hp) + p["bg"][i, 0]
        g = 1.0 / (1.0 + jnp.exp(-z))
        r = g * f + xi
        mean = jnp.mean(r, axis=-1, keepdims=True)
        var = jnp.mean(jnp.square(r - mean), axis=-1, keepdims=True)
        outs.append((r - mean) * jax.lax.rsqrt(var + LN_EPS)
                    * p["gamma"][i, 0] + p["beta"][i, 0])
    var_outputs = jnp.stack(outs, axis=1)                               # [M, N, D]
    flat = xr.reshape(B * T, N * D)
    h = jnp.maximum(jnp.dot(flat, p["wn1"], precision=hp) + p["bn1"], 0.0)
    logits = jnp.dot(h, p["wn2"], precision=hp) + p["bn2"]
    logits = logits - jnp.max(logits, axis=-1, keepdims=True)
    e = jnp.exp(logits)
    w = e / jnp.sum(e, axis=-1, keepdims=True)                          # [M, N]
    weighted = jnp.sum(w[..., None] * var_outputs, axis=1)              # [M, D]
    return weighted.reshape(B, T, D), w.reshape(B, T, N)


if __name__ == "__main__":
    key = jax.random.PRNGKey(0)
    kx, kp = jax.random.split(key)
    # 4-D branch of the module's forward: x is [B, T, N, D].
    x = jax.random.normal(kx, (BATCH, SEQ_LEN, NUM_VARS, INPUT_DIM), dtype=jnp.float32)
    params = init_params(kp)
    packed = pack_params(params)

    fwd = jax.jit(vsn_forward)
    weighted, weights = fwd(x, packed)
    jax.block_until_ready((weighted, weights))

    assert weighted.shape == (BATCH, SEQ_LEN, INPUT_DIM), weighted.shape
    assert weights.shape == (BATCH, SEQ_LEN, NUM_VARS), weights.shape

    # Correctness check vs. pure-JAX reference (loose tolerance absorbs MXU
    # f32 precision-mode differences and the approx softmax reciprocal;
    # structural bugs would give O(1) errors).
    ref_weighted, ref_weights = vsn_reference(x, params)
    err = max(float(jnp.max(jnp.abs(weighted - ref_weighted))),
              float(jnp.max(jnp.abs(weights - ref_weights))))
    assert err < 2e-2, f"mismatch vs reference: {err}"
    print("KERNEL_OK")
</pallas_src>

<mosaic_0001>
module attributes {stable_mosaic.version = 11 : i64} {
  func.func @vsn_kernel(%arg0: memref<16x64xf32, #tpu.memory_space<vmem>>, %arg1: memref<496x128xf32, #tpu.memory_space<vmem>>, %arg2: memref<8x128xf32, #tpu.memory_space<vmem>>, %arg3: memref<16x128xf32, #tpu.memory_space<vmem>>) attributes {dimension_semantics = [], scalar_prefetch = 0 : i64, scratch_operands = 0 : i64, tpu.core_type = #tpu.core_type<tc>} {
    %c0 = arith.constant 0 : index
    %c0_0 = arith.constant 0 : index
    %0 = vector.load %arg0[%c0, %c0_0] : memref<16x64xf32, #tpu.memory_space<vmem>>, vector<16x64xf32>
    %c0_1 = arith.constant 0 : index
    %c0_2 = arith.constant 0 : index
    %1 = vector.load %arg1[%c0_1, %c0_2] : memref<496x128xf32, #tpu.memory_space<vmem>>, vector<64x128xf32>
    %c64 = arith.constant 64 : index
    %c0_3 = arith.constant 0 : index
    %2 = vector.load %arg1[%c64, %c0_3] : memref<496x128xf32, #tpu.memory_space<vmem>>, vector<128x64xf32>
    %c192 = arith.constant 192 : index
    %c0_4 = arith.constant 0 : index
    %3 = vector.load %arg1[%c192, %c0_4] : memref<496x128xf32, #tpu.memory_space<vmem>>, vector<64x64xf32>
    %c256 = arith.constant 256 : index
    %c0_5 = arith.constant 0 : index
    %4 = vector.load %arg1[%c256, %c0_5] : memref<496x128xf32, #tpu.memory_space<vmem>>, vector<64x32xf32>
    %c320 = arith.constant 320 : index
    %c0_6 = arith.constant 0 : index
    %5 = vector.load %arg1[%c320, %c0_6] : memref<496x128xf32, #tpu.memory_space<vmem>>, vector<32x4xf32>
    %c352 = arith.constant 352 : index
    %c0_7 = arith.constant 0 : index
    %6 = vector.load %arg1[%c352, %c0_7] : memref<496x128xf32, #tpu.memory_space<vmem>>, vector<64x64xf32>
    %c416 = arith.constant 416 : index
    %c0_8 = arith.constant 0 : index
    %7 = vector.load %arg1[%c416, %c0_8] : memref<496x128xf32, #tpu.memory_space<vmem>>, vector<4x64xf32>
    %c424 = arith.constant 424 : index
    %c0_9 = arith.constant 0 : index
    %8 = vector.load %arg1[%c424, %c0_9] : memref<496x128xf32, #tpu.memory_space<vmem>>, vector<64x128xf32>
    %c488 = arith.constant 488 : index
    %c0_10 = arith.constant 0 : index
    %9 = vector.load %arg1[%c488, %c0_10] : memref<496x128xf32, #tpu.memory_space<vmem>>, vector<4x128xf32>
    %c0_11 = arith.constant 0 : index
    %c0_12 = arith.constant 0 : index
    %10 = vector.load %arg2[%c0_11, %c0_12] : memref<8x128xf32, #tpu.memory_space<vmem>>, vector<1x128xf32>
    %c1 = arith.constant 1 : index
    %c0_13 = arith.constant 0 : index
    %11 = vector.load %arg2[%c1, %c0_13] : memref<8x128xf32, #tpu.memory_space<vmem>>, vector<1x64xf32>
    %c2 = arith.constant 2 : index
    %c0_14 = arith.constant 0 : index
    %12 = vector.load %arg2[%c2, %c0_14] : memref<8x128xf32, #tpu.memory_space<vmem>>, vector<1x64xf32>
    %c3 = arith.constant 3 : index
    %c0_15 = arith.constant 0 : index
    %13 = vector.load %arg2[%c3, %c0_15] : memref<8x128xf32, #tpu.memory_space<vmem>>, vector<1x64xf32>
    %c4 = arith.constant 4 : index
    %c0_16 = arith.constant 0 : index
    %14 = vector.load %arg2[%c4, %c0_16] : memref<8x128xf32, #tpu.memory_space<vmem>>, vector<1x64xf32>
    %c5 = arith.constant 5 : index
    %c0_17 = arith.constant 0 : index
    %15 = vector.load %arg2[%c5, %c0_17] : memref<8x128xf32, #tpu.memory_space<vmem>>, vector<1x32xf32>
    %c6 = arith.constant 6 : index
    %c0_18 = arith.constant 0 : index
    %16 = vector.load %arg2[%c6, %c0_18] : memref<8x128xf32, #tpu.memory_space<vmem>>, vector<1x4xf32>
    %cst = arith.constant dense<0.000000e+00> : vector<16x32xf32>
    %17 = tpu.matmul %0, %4, %cst {dimension_numbers = #tpu.dot_dimension_numbers<[1], [0], [0], [1], [0, 0, 1, 1], [], []>} : vector<16x64xf32>, vector<64x32xf32>, vector<16x32xf32> -> vector<16x32xf32>
    %18 = vector.broadcast %15 : vector<1x32xf32> to vector<16x32xf32>
    %19 = arith.addf %17, %18 : vector<16x32xf32>
    %cst_19 = arith.constant 0.000000e+00 : f32
    %20 = vector.broadcast %cst_19 : f32 to vector<16x32xf32>
    %21 = arith.maximumf %19, %20 : vector<16x32xf32>
    %cst_20 = arith.constant dense<0.000000e+00> : vector<16x4xf32>
    %22 = tpu.matmul %21, %5, %cst_20 {dimension_numbers = #tpu.dot_dimension_numbers<[1], [0], [0], [1], [0, 0, 1, 1], [], []>} : vector<16x32xf32>, vector<32x4xf32>, vector<16x4xf32> -> vector<16x4xf32>
    %23 = vector.broadcast %16 : vector<1x4xf32> to vector<16x4xf32>
    %24 = arith.addf %22, %23 : vector<16x4xf32>
    %cst_21 = arith.constant dense<0xFF800000> : vector<16xf32>
    %25 = vector.multi_reduction <maximumf>, %24, %cst_21 [1] : vector<16x4xf32> to vector<16xf32>
    %26 = vector.shape_cast %25 : vector<16xf32> to vector<16x1xf32>
    %27 = vector.broadcast %26 : vector<16x1xf32> to vector<16x4xf32>
    %28 = arith.subf %24, %27 : vector<16x4xf32>
    %29 = math.exp %28 : vector<16x4xf32>
    %cst_22 = arith.constant dense<0.000000e+00> : vector<16xf32>
    %30 = vector.multi_reduction <add>, %29, %cst_22 [1] : vector<16x4xf32> to vector<16xf32>
    %31 = vector.shape_cast %30 : vector<16xf32> to vector<16x1xf32>
    %32 = tpu.reciprocal %31 {approx = true} : vector<16x1xf32> -> vector<16x1xf32>
    %33 = vector.broadcast %32 : vector<16x1xf32> to vector<16x4xf32>
    %34 = arith.mulf %29, %33 : vector<16x4xf32>
    %cst_23 = arith.constant dense<0.000000e+00> : vector<16x128xf32>
    %35 = tpu.matmul %0, %1, %cst_23 {dimension_numbers = #tpu.dot_dimension_numbers<[1], [0], [0], [1], [0, 0, 1, 1], [], []>} : vector<16x64xf32>, vector<64x128xf32>, vector<16x128xf32> -> vector<16x128xf32>
    %36 = vector.broadcast %10 : vector<1x128xf32> to vector<16x128xf32>
    %37 = arith.addf %35, %36 : vector<16x128xf32>
    %cst_24 = arith.constant 0.000000e+00 : f32
    %38 = vector.broadcast %cst_24 : f32 to vector<16x128xf32>
    %39 = arith.cmpf ogt, %37, %38 : vector<16x128xf32>
    %cst_25 = arith.constant 0.000000e+00 : f32
    %40 = vector.broadcast %cst_25 : f32 to vector<16x128xf32>
    %41 = arith.minimumf %37, %40 : vector<16x128xf32>
    %42 = math.exp %41 : vector<16x128xf32>
    %cst_26 = arith.constant 1.000000e+00 : f32
    %43 = vector.broadcast %cst_26 : f32 to vector<16x128xf32>
    %44 = arith.subf %42, %43 : vector<16x128xf32>
    %45 = arith.select %39, %37, %44 : vector<16x128xi1>, vector<16x128xf32>
    %cst_27 = arith.constant dense<0.000000e+00> : vector<16x64xf32>
    %46 = tpu.matmul %45, %2, %cst_27 {dimension_numbers = #tpu.dot_dimension_numbers<[1], [0], [0], [1], [0, 0, 1, 1], [], []>} : vector<16x128xf32>, vector<128x64xf32>, vector<16x64xf32> -> vector<16x64xf32>
    %47 = vector.broadcast %11 : vector<1x64xf32> to vector<16x64xf32>
    %48 = arith.addf %46, %47 : vector<16x64xf32>
    %cst_28 = arith.constant dense<0.000000e+00> : vector<16x64xf32>
    %49 = tpu.matmul %48, %3, %cst_28 {dimension_numbers = #tpu.dot_dimension_numbers<[1], [0], [0], [1], [0, 0, 1, 1], [], []>} : vector<16x64xf32>, vector<64x64xf32>, vector<16x64xf32> -> vector<16x64xf32>
    %50 = vector.broadcast %12 : vector<1x64xf32> to vector<16x64xf32>
    %51 = arith.addf %49, %50 : vector<16x64xf32>
    %52 = arith.negf %51 : vector<16x64xf32>
    %53 = math.exp %52 : vector<16x64xf32>
    %cst_29 = arith.constant 1.000000e+00 : f32
    %54 = vector.broadcast %cst_29 : f32 to vector<16x64xf32>
    %55 = arith.addf %54, %53 : vector<16x64xf32>
    %56 = arith.divf %54, %55 : vector<16x64xf32>
    %57 = arith.mulf %56, %48 : vector<16x64xf32>
    %58 = arith.addf %57, %0 : vector<16x64xf32>
    %cst_30 = arith.constant dense<0.000000e+00> : vector<16x64xf32>
    %59 = tpu.matmul %58, %6, %cst_30 {dimension_numbers = #tpu.dot_dimension_numbers<[1], [0], [0], [1], [0, 0, 1, 1], [], []>} : vector<16x64xf32>, vector<64x64xf32>, vector<16x64xf32> -> vector<16x64xf32>
    %60 = arith.subf %58, %59 : vector<16x64xf32>
    %61 = arith.mulf %60, %60 : vector<16x64xf32>
    %cst_31 = arith.constant dense<0.000000e+00> : vector<16x64xf32>
    %62 = tpu.matmul %61, %6, %cst_31 {dimension_numbers = #tpu.dot_dimension_numbers<[1], [0], [0], [1], [0, 0, 1, 1], [], []>} : vector<16x64xf32>, vector<64x64xf32>, vector<16x64xf32> -> vector<16x64xf32>
    %cst_32 = arith.constant 9.99999974E-6 : f32
    %63 = vector.broadcast %cst_32 : f32 to vector<16x64xf32>
    %64 = arith.addf %62, %63 : vector<16x64xf32>
    %65 = math.rsqrt %64 : vector<16x64xf32>
    %66 = arith.mulf %60, %65 : vector<16x64xf32>
    %67 = vector.broadcast %13 : vector<1x64xf32> to vector<16x64xf32>
    %68 = arith.mulf %66, %67 : vector<16x64xf32>
    %69 = vector.broadcast %14 : vector<1x64xf32> to vector<16x64xf32>
    %70 = arith.addf %68, %69 : vector<16x64xf32>
    %cst_33 = arith.constant dense<0.000000e+00> : vector<16x64xf32>
    %71 = tpu.matmul %34, %7, %cst_33 {dimension_numbers = #tpu.dot_dimension_numbers<[1], [0], [0], [1], [0, 0, 1, 1], [], []>} : vector<16x4xf32>, vector<4x64xf32>, vector<16x64xf32> -> vector<16x64xf32>
    %72 = arith.mulf %71, %70 : vector<16x64xf32>
    %cst_34 = arith.constant dense<0.000000e+00> : vector<16x128xf32>
    %73 = tpu.matmul %72, %8, %cst_34 {dimension_numbers = #tpu.dot_dimension_numbers<[1], [0], [0], [1], [0, 0, 1, 1], [], []>} : vector<16x64xf32>, vector<64x128xf32>, vector<16x128xf32> -> vector<16x128xf32>
    %cst_35 = arith.constant dense<0.000000e+00> : vector<16x128xf32>
    %74 = tpu.matmul %34, %9, %cst_35 {dimension_numbers = #tpu.dot_dimension_numbers<[1], [0], [0], [1], [0, 0, 1, 1], [], []>} : vector<16x4xf32>, vector<4x128xf32>, vector<16x128xf32> -> vector<16x128xf32>
    %75 = arith.addf %73, %74 : vector<16x128xf32>
    %c0_36 = arith.constant 0 : index
    %c0_37 = arith.constant 0 : index
    %76 = vector.load %arg3[%c0_36, %c0_37] : memref<16x128xf32, #tpu.memory_space<vmem>>, vector<16x128xf32>
    tpu.vector_store %arg3[%c0_36, %c0_37], %75 {strides = array<i32>} : memref<16x128xf32, #tpu.memory_space<vmem>>, vector<16x128xf32>,
    return
  }
}

</mosaic_0001>

<llo_original>
// kernel: vsn_forward.1
$region0: #{vsn_forward.1}
  #allocation0 [shape = 'u32[]', space=smem, size = 0x4, offset = 0x4, fixed_abs, tag = 'smem constant byte address 0x4 - core index']
  #allocation1 [shape = 'u32[144,128]{1,0:T(1,128)}', space=vmem, size = 0x12000, scoped, tag = 'internal scratch']
  %s0 = inlined_call_operand.vmem [shape: f32[16,64], index: 0, kind: input, shape index: {}]
  %s1 = inlined_call_operand.hbm [shape: f32[496,128], index: 1, kind: input, shape index: {}]
  %s2 = inlined_call_operand.vmem [shape: f32[8,128], index: 2, kind: input, shape index: {}]
  %s3 = inlined_call_operand.vmem [shape: f32[16,128], index: 3, kind: output, shape index: {}]
  %s4 = sld [smem:[#allocation0]]
  $region26: #{vsn_forward.1} parent=0
    _
  %s6 = ssub.s32 1, %s4
  %s7 = scalar_select 0, %s6, %s4
  $region1: #{vsn_forward.1} parent=0
    #allocation2 [shape = 'u8[253952]{0}', space=vmem, size = 0x3e000, scoped, tag = 'input window, operand 1, single buffered']
    #allocation3 [shape = 's32[1]{0}', space=sflag, size = 0x4, scoped, tag = 'scoped memory for vsn_forward.1']
    %8 = vsyncpa [#allocation3], 0
    // Predicated region
    $region2: #{vsn_forward.1} parent=1 // pred_check
      _
    $region3: #{vsn_forward.1} parent=1 // pred_check_branch
      %10 = sbr.rel (0) target = $region5
    $region4: #{vsn_forward.1} parent=1 // pred_region
      _
    $region5: #{vsn_forward.1} parent=1 // pred_fallthru
      _
    // Predicated region
    $region6: #{vsn_forward.1} parent=1 // pred_check
      _
    $region7: #{vsn_forward.1} parent=1 // pred_check_branch
      %12 = sbr.rel (0) target = $region9
    $region8: #{vsn_forward.1} parent=1 // pred_region
      %s14 = ssub.s32 7936, 7936
      %15 = vsyncadd [#allocation3], %s14
      %s16 = sshll.u32 [#allocation2], 4
      %s17 = int_to_ptr.vmem [resolvable:$true] %s16
      %22 = dma.hbm_to_vmem [thread:$0]  %s1, 7936, %s17, [#allocation3], 128, 128, 8
    $region9: #{vsn_forward.1} parent=1 // pred_fallthru
      _
    // Predicated region
    $region10: #{vsn_forward.1} parent=1 // pred_check
      _
    $region11: #{vsn_forward.1} parent=1 // pred_check_branch
      %24 = sbr.rel (0) target = $region13
    $region12: #{vsn_forward.1} parent=1 // pred_region
      _
    $region13: #{vsn_forward.1} parent=1 // pred_fallthru
      _
    // Predicated region
    $region14: #{vsn_forward.1} parent=1 // pred_check
      _
    $region15: #{vsn_forward.1} parent=1 // pred_check_branch
      %26 = sbr.rel (0) target = $region17
    $region16: #{vsn_forward.1} parent=1 // pred_region
      %27 = dma.done [#allocation3], 7936
    $region17: #{vsn_forward.1} parent=1 // pred_fallthru
      _
    %v28 = vld [vmem:[%s0] sm:$0xff]
    %v29 = vld [vmem:[%s0 + $0x8] sm:$0xff]
    %v30 = vld [vmem:[#allocation2] sm:$0xff]
    %v31 = vld [vmem:[#allocation2 + $0x8] sm:$0xff]
    %v32 = vld [vmem:[#allocation2 + $0x10] sm:$0xff]
    %v33 = vld [vmem:[#allocation2 + $0x18] sm:$0xff]
    %v34 = vld [vmem:[#allocation2 + $0x20] sm:$0xff]
    %v35 = vld [vmem:[#allocation2 + $0x28] sm:$0xff]
    %v36 = vld [vmem:[#allocation2 + $0x30] sm:$0xff]
    %v37 = vld [vmem:[#allocation2 + $0x38] sm:$0xff]
    %v38 = vld [vmem:[#allocation2 + $0x40] sm:$0xff]
    %v39 = vld [vmem:[#allocation2 + $0x48] sm:$0xff]
    %v40 = vld [vmem:[#allocation2 + $0x50] sm:$0xff]
    %v41 = vld [vmem:[#allocation2 + $0x58] sm:$0xff]
    %v42 = vld [vmem:[#allocation2 + $0x60] sm:$0xff]
    %v43 = vld [vmem:[#allocation2 + $0x68] sm:$0xff]
    %v44 = vld [vmem:[#allocation2 + $0x70] sm:$0xff]
    %v45 = vld [vmem:[#allocation2 + $0x78] sm:$0xff]
    %v46 = vld [vmem:[#allocation2 + $0x80] sm:$0xff]
    %v47 = vld [vmem:[#allocation2 + $0x88] sm:$0xff]
    %v48 = vld [vmem:[#allocation2 + $0x90] sm:$0xff]
    %v49 = vld [vmem:[#allocation2 + $0x98] sm:$0xff]
    %v50 = vld [vmem:[#allocation2 + $0xa0] sm:$0xff]
    %v51 = vld [vmem:[#allocation2 + $0xa8] sm:$0xff]
    %v52 = vld [vmem:[#allocation2 + $0xb0] sm:$0xff]
    %v53 = vld [vmem:[#allocation2 + $0xb8] sm:$0xff]
    %v54 = vld [vmem:[#allocation2 + $0xc0] sm:$0xff]
    %v55 = vld [vmem:[#allocation2 + $0xc8] sm:$0xff]
    %v56 = vld [vmem:[#allocation2 + $0xd0] sm:$0xff]
    %v57 = vld [vmem:[#allocation2 + $0xd8] sm:$0xff]
    %v58 = vld [vmem:[#allocation2 + $0xe0] sm:$0xff]
    %v59 = vld [vmem:[#allocation2 + $0xe8] sm:$0xff]
    %v60 = vld [vmem:[#allocation2 + $0xf0] sm:$0xff]
    %v61 = vld [vmem:[#allocation2 + $0xf8] sm:$0xff]
    %v62 = vld [vmem:[#allocation2 + $0x100] sm:$0xff]
    %v63 = vld [vmem:[#allocation2 + $0x108] sm:$0xff]
    %v64 = vld [vmem:[#allocation2 + $0x110] sm:$0xff]
    %v65 = vld [vmem:[#allocation2 + $0x118] sm:$0xff]
    %v66 = vld [vmem:[#allocation2 + $0x120] sm:$0xff]
    %v67 = vld [vmem:[#allocation2 + $0x128] sm:$0xff]
    %v68 = vld [vmem:[#allocation2 + $0x130] sm:$0xff]
    %v69 = vld [vmem:[#allocation2 + $0x138] sm:$0xff]
    %v70 = vld [vmem:[#allocation2 + $0x140] sm:$0xff]
    %v71 = vld [vmem:[#allocation2 + $0x148] sm:$0xff]
    %v72 = vld [vmem:[#allocation2 + $0x150] sm:$0xff]
    %v73 = vld [vmem:[#allocation2 + $0x158] sm:$0xff]
    %v74 = vld [vmem:[#allocation2 + $0x160] sm:$0xff]
    %v75 = vld [vmem:[#allocation2 + $0x168] sm:$0xff]
    %v76 = vld [vmem:[#allocation2 + $0x170] sm:$0xff]
    %v77 = vld [vmem:[#allocation2 + $0x178] sm:$0xff]
    %v78 = vld [vmem:[#allocation2 + $0x180] sm:$0xff]
    %v79 = vld [vmem:[#allocation2 + $0x188] sm:$0xff]
    %v80 = vld [vmem:[#allocation2 + $0x190] sm:$0xff]
    %v81 = vld [vmem:[#allocation2 + $0x198] sm:$0xff]
    %v82 = vld [vmem:[#allocation2 + $0x1a0] sm:$0xf]
    %v83 = vld [vmem:[#allocation2 + $0x1a8] sm:$0xff]
    %v84 = vld [vmem:[#allocation2 + $0x1b0] sm:$0xff]
    %v85 = vld [vmem:[#allocation2 + $0x1b8] sm:$0xff]
    %v86 = vld [vmem:[#allocation2 + $0x1c0] sm:$0xff]
    %v87 = vld [vmem:[#allocation2 + $0x1c8] sm:$0xff]
    %v88 = vld [vmem:[#allocation2 + $0x1d0] sm:$0xff]
    %v89 = vld [vmem:[#allocation2 + $0x1d8] sm:$0xff]
    %v90 = vld [vmem:[#allocation2 + $0x1e0] sm:$0xff]
    %v91 = vld [vmem:[#allocation2 + $0x1e8] sm:$0xf]
    %v92 = vld [vmem:[%s2] sm:$0x1]
    %v93 = vld [vmem:[%s2 + $0x1] sm:$0x1]
    %v94 = vld [vmem:[%s2 + $0x2] sm:$0x1]
    %v95 = vld [vmem:[%s2 + $0x3] sm:$0x1]
    %v96 = vld [vmem:[%s2 + $0x4] sm:$0x1]
    %v97 = vld [vmem:[%s2 + $0x5] sm:$0x1]
    %v98 = vld [vmem:[%s2 + $0x6] sm:$0x1]
    %v99 = vlaneseq
    %v100 = vshrl.u32 %v99, 7
    %v101 = vsub.s32 0, %v100
    %v102 = vrot.slane %v97, %v101
    %vm103 = vcmask 523264
    %v105 = vsel %vm103, %v28, 0
    %v108 = vsel %vm103, %v29, 0
    %110 = vmatprep.subr.mxu0 0.0
    %111 = vmatpush1.msra.mxu0 %v62
    %112 = vmatprep.subr.mxu0 0.0
    %113 = vmatpush1.msra.mxu0 %v63
    %114 = vmatprep.subr.mxu0 0.0
    %115 = vmatpush1.msra.mxu0 %v64
    %116 = vmatprep.subr.mxu0 0.0
    %117 = vmatpush1.msra.mxu0 %v65
    %118 = vmatprep.subr.mxu0 0.0
    %119 = vmatpush1.msra.mxu0 %v66
    %120 = vmatprep.subr.mxu0 0.0
    %121 = vmatpush1.msra.mxu0 %v67
    %122 = vmatprep.subr.mxu0 0.0
    %123 = vmatpush1.msra.mxu0 %v68
    %124 = vmatprep.subr.mxu0 0.0
    %125 = vmatpush1.msra.mxu0 %v69
    %126 = vmatprep.subr.mxu0 0.0
    %127 = vmatpush1.msra.mxu0 0.0
    %128 = vmatprep.subr.mxu0 0.0
    %129 = vmatpush1.msra.mxu0 0.0
    %130 = vmatprep.subr.mxu0 0.0
    %131 = vmatpush1.msra.mxu0 0.0
    %132 = vmatprep.subr.mxu0 0.0
    %133 = vmatpush1.msra.mxu0 0.0
    %134 = vmatprep.subr.mxu0 0.0
    %135 = vmatpush1.msra.mxu0 0.0
    %136 = vmatprep.subr.mxu0 0.0
    %137 = vmatpush1.msra.mxu0 0.0
    %138 = vmatprep.subr.mxu0 0.0
    %139 = vmatpush1.msra.mxu0 0.0
    %140 = vmatprep.subr.mxu0 0.0
    %141 = vmatpush1.msra.mxu0 0.0
    %142 = vmatprep.subr.mxu0 0.0
    %143 = vmatpush1.msra.mxu0 0.0
    %144 = vmatprep.subr.mxu0 0.0
    %145 = vmatpush1.msra.mxu0 0.0
    %146 = vmatprep.subr.mxu0 0.0
    %147 = vmatpush1.msra.mxu0 0.0
    %148 = vmatprep.subr.mxu0 0.0
    %149 = vmatpush1.msra.mxu0 0.0
    %150 = vmatprep.subr.mxu0 0.0
    %151 = vmatpush1.msra.mxu0 0.0
    %152 = vmatprep.subr.mxu0 0.0
    %153 = vmatpush1.msra.mxu0 0.0
    %154 = vmatprep.subr.mxu0 0.0
    %155 = vmatpush1.msra.mxu0 0.0
    %156 = vmatprep.subr.mxu0 0.0
    %157 = vmatpush1.msra.mxu0 0.0
    %158 = vmatprep.subr.mxu0 0.0
    %159 = vmatpush1.msra.mxu0 0.0
    %160 = vmatprep.subr.mxu0 0.0
    %161 = vmatpush1.msra.mxu0 0.0
    %162 = vmatprep.subr.mxu0 0.0
    %163 = vmatpush1.msra.mxu0 0.0
    %164 = vmatprep.subr.mxu0 0.0
    %165 = vmatpush1.msra.mxu0 0.0
    %166 = vmatprep.subr.mxu0 0.0
    %167 = vmatpush1.msra.mxu0 0.0
    %168 = vmatprep.subr.mxu0 0.0
    %169 = vmatpush1.msra.mxu0 0.0
    %170 = vmatprep.subr.mxu0 0.0
    %171 = vmatpush1.msra.mxu0 0.0
    %172 = vmatprep.subr.mxu0 0.0
    %173 = vmatpush1.msra.mxu0 0.0
    %174 = vmatprep.mubr.f32.mxu0 0.0
    %175 = vmatmul.mubr.f32.gmra.mrb[0].mxu0 %v105
    %v176 = vpop.f32.mrb[0].mxu0
    %v177 = vadd.f32 %v102, %v176
    %v178 = vpop.f32.mrb[0].mxu0
    %179 = vmatprep.mubr.f32.mxu0 0.0
    %180 = vmatmul.mubr.f32.gmra.mrb[0].mxu0 %v108
    %v181 = vpop.f32.mrb[0].mxu0
    %v182 = vadd.f32 %v102, %v181
    %v183 = vpop.f32.mrb[0].mxu0
    %184 = vdwg.mxu0
    %v185 = vmax.f32 %v177, 0.0
    %v186 = vmax.f32 %v182, 0.0
    %v187 = vlaneseq
    %v188 = vshrl.u32 %v187, 7
    %v189 = vsub.s32 0, %v188
    %v190 = vrot.slane %v98, %v189
    %vm191 = vcmask 261120
    %v193 = vsel %vm191, %v185, 0
    %v196 = vsel %vm191, %v186, 0
    %198 = vmatprep.subr.mxu0 0.0
    %199 = vmatpush1.msra.mxu0 %v70
    %200 = vmatprep.subr.mxu0 0.0
    %201 = vmatpush1.msra.mxu0 %v71
    %202 = vmatprep.subr.mxu0 0.0
    %203 = vmatpush1.msra.mxu0 %v72
    %204 = vmatprep.subr.mxu0 0.0
    %205 = vmatpush1.msra.mxu0 %v73
    %206 = vmatprep.subr.mxu0 0.0
    %207 = vmatpush1.msra.mxu0 0.0
    %208 = vmatprep.subr.mxu0 0.0
    %209 = vmatpush1.msra.mxu0 0.0
    %210 = vmatprep.subr.mxu0 0.0
    %211 = vmatpush1.msra.mxu0 0.0
    %212 = vmatprep.subr.mxu0 0.0
    %213 = vmatpush1.msra.mxu0 0.0
    %214 = vmatprep.subr.mxu0 0.0
    %215 = vmatpush1.msra.mxu0 0.0
    %216 = vmatprep.subr.mxu0 0.0
    %217 = vmatpush1.msra.mxu0 0.0
    %218 = vmatprep.subr.mxu0 0.0
    %219 = vmatpush1.msra.mxu0 0.0
    %220 = vmatprep.subr.mxu0 0.0
    %221 = vmatpush1.msra.mxu0 0.0
    %222 = vmatprep.subr.mxu0 0.0
    %223 = vmatpush1.msra.mxu0 0.0
    %224 = vmatprep.subr.mxu0 0.0
    %225 = vmatpush1.msra.mxu0 0.0
    %226 = vmatprep.subr.mxu0 0.0
    %227 = vmatpush1.msra.mxu0 0.0
    %228 = vmatprep.subr.mxu0 0.0
    %229 = vmatpush1.msra.mxu0 0.0
    %230 = vmatprep.subr.mxu0 0.0
    %231 = vmatpush1.msra.mxu0 0.0
    %232 = vmatprep.subr.mxu0 0.0
    %233 = vmatpush1.msra.mxu0 0.0
    %234 = vmatprep.subr.mxu0 0.0
    %235 = vmatpush1.msra.mxu0 0.0
    %236 = vmatprep.subr.mxu0 0.0
    %237 = vmatpush1.msra.mxu0 0.0
    %238 = vmatprep.subr.mxu0 0.0
    %239 = vmatpush1.msra.mxu0 0.0
    %240 = vmatprep.subr.mxu0 0.0
    %241 = vmatpush1.msra.mxu0 0.0
    %242 = vmatprep.subr.mxu0 0.0
    %243 = vmatpush1.msra.mxu0 0.0
    %244 = vmatprep.subr.mxu0 0.0
    %245 = vmatpush1.msra.mxu0 0.0
    %246 = vmatprep.subr.mxu0 0.0
    %247 = vmatpush1.msra.mxu0 0.0
    %248 = vmatprep.subr.mxu0 0.0
    %249 = vmatpush1.msra.mxu0 0.0
    %250 = vmatprep.subr.mxu0 0.0
    %251 = vmatpush1.msra.mxu0 0.0
    %252 = vmatprep.subr.mxu0 0.0
    %253 = vmatpush1.msra.mxu0 0.0
    %254 = vmatprep.subr.mxu0 0.0
    %255 = vmatpush1.msra.mxu0 0.0
    %256 = vmatprep.subr.mxu0 0.0
    %257 = vmatpush1.msra.mxu0 0.0
    %258 = vmatprep.subr.mxu0 0.0
    %259 = vmatpush1.msra.mxu0 0.0
    %260 = vmatprep.subr.mxu0 0.0
    %261 = vmatpush1.msra.mxu0 0.0
    %262 = vmatprep.mubr.f32.mxu0 0.0
    %263 = vmatmul.mubr.f32.gmra.mrb[0].mxu0 %v193
    %v264 = vpop.f32.mrb[0].mxu0
    %v265 = vadd.f32 %v190, %v264
    %v266 = vpop.f32.mrb[0].mxu0
    %267 = vmatprep.mubr.f32.mxu0 0.0
    %268 = vmatmul.mubr.f32.gmra.mrb[0].mxu0 %v196
    %v269 = vpop.f32.mrb[0].mxu0
    %v270 = vadd.f32 %v190, %v269
    %v271 = vpop.f32.mrb[0].mxu0
    %272 = vdwg.mxu0
    %vm273 = vcmask 31744
    %v274 = vsel %vm273, %v265, -inf
    %275 = vmax.xlane.f32.xlu0 %v274
    %v276 = vpop.xlane.xlu0 %275
    %v277 = vsel %vm273, %v270, -inf
    %278 = vmax.xlane.f32.xlu0 %v277
    %v279 = vpop.xlane.xlu0 %278
    %v280 = vsub.f32 %v265, %v276
    %v281 = vsub.f32 %v270, %v279
    %v282 = vmul.f32 %v280, 1.442695
    %v283 = vpow.pop %v282
    %v284 = vmul.f32 %v281, 1.442695
    %v285 = vpow.pop %v284
    %v286 = vsel %vm273, %v283, 0.0
    %287 = vadd.xlane.f32.xlu0 %v286
    %v288 = vpop.xlane.xlu0 %287
    %v289 = vsel %vm273, %v285, 0.0
    %290 = vadd.xlane.f32.xlu0 %v289
    %v291 = vpop.xlane.xlu0 %290
    %v292 = vrcp.pop %v288
    %v293 = vrcp.pop %v291
    %v294 = vmul.f32 %v283, %v292
    %v295 = vmul.f32 %v285, %v293
    %v296 = vlaneseq
    %v297 = vshrl.u32 %v296, 7
    %v298 = vsub.s32 0, %v297
    %v299 = vrot.slane %v92, %v298
    %300 = vmatprep.subr.mxu0 0.0
    %301 = vmatpush1.msra.mxu0 %v30
    %302 = vmatprep.subr.mxu0 0.0
    %303 = vmatpush1.msra.mxu0 %v31
    %304 = vmatprep.subr.mxu0 0.0
    %305 = vmatpush1.msra.mxu0 %v32
    %306 = vmatprep.subr.mxu0 0.0
    %307 = vmatpush1.msra.mxu0 %v33
    %308 = vmatprep.subr.mxu0 0.0
    %309 = vmatpush1.msra.mxu0 %v34
    %310 = vmatprep.subr.mxu0 0.0
    %311 = vmatpush1.msra.mxu0 %v35
    %312 = vmatprep.subr.mxu0 0.0
    %313 = vmatpush1.msra.mxu0 %v36
    %314 = vmatprep.subr.mxu0 0.0
    %315 = vmatpush1.msra.mxu0 %v37
    %316 = vmatprep.subr.mxu0 0.0
    %317 = vmatpush1.msra.mxu0 0.0
    %318 = vmatprep.subr.mxu0 0.0
    %319 = vmatpush1.msra.mxu0 0.0
    %320 = vmatprep.subr.mxu0 0.0
    %321 = vmatpush1.msra.mxu0 0.0
    %322 = vmatprep.subr.mxu0 0.0
    %323 = vmatpush1.msra.mxu0 0.0
    %324 = vmatprep.subr.mxu0 0.0
    %325 = vmatpush1.msra.mxu0 0.0
    %326 = vmatprep.subr.mxu0 0.0
    %327 = vmatpush1.msra.mxu0 0.0
    %328 = vmatprep.subr.mxu0 0.0
    %329 = vmatpush1.msra.mxu0 0.0
    %330 = vmatprep.subr.mxu0 0.0
    %331 = vmatpush1.msra.mxu0 0.0
    %332 = vmatprep.subr.mxu0 0.0
    %333 = vmatpush1.msra.mxu0 0.0
    %334 = vmatprep.subr.mxu0 0.0
    %335 = vmatpush1.msra.mxu0 0.0
    %336 = vmatprep.subr.mxu0 0.0
    %337 = vmatpush1.msra.mxu0 0.0
    %338 = vmatprep.subr.mxu0 0.0
    %339 = vmatpush1.msra.mxu0 0.0
    %340 = vmatprep.subr.mxu0 0.0
    %341 = vmatpush1.msra.mxu0 0.0
    %342 = vmatprep.subr.mxu0 0.0
    %343 = vmatpush1.msra.mxu0 0.0
    %344 = vmatprep.subr.mxu0 0.0
    %345 = vmatpush1.msra.mxu0 0.0
    %346 = vmatprep.subr.mxu0 0.0
    %347 = vmatpush1.msra.mxu0 0.0
    %348 = vmatprep.subr.mxu0 0.0
    %349 = vmatpush1.msra.mxu0 0.0
    %350 = vmatprep.subr.mxu0 0.0
    %351 = vmatpush1.msra.mxu0 0.0
    %352 = vmatprep.subr.mxu0 0.0
    %353 = vmatpush1.msra.mxu0 0.0
    %354 = vmatprep.subr.mxu0 0.0
    %355 = vmatpush1.msra.mxu0 0.0
    %356 = vmatprep.subr.mxu0 0.0
    %357 = vmatpush1.msra.mxu0 0.0
    %358 = vmatprep.subr.mxu0 0.0
    %359 = vmatpush1.msra.mxu0 0.0
    %360 = vmatprep.subr.mxu0 0.0
    %361 = vmatpush1.msra.mxu0 0.0
    %362 = vmatprep.subr.mxu0 0.0
    %363 = vmatpush1.msra.mxu0 0.0
    %364 = vmatprep.mubr.f32.mxu0 0.0
    %365 = vmatmul.mubr.f32.gmra.mrb[0].mxu0 %v105
    %v366 = vpop.f32.mrb[0].mxu0
    %v367 = vadd.f32 %v299, %v366
    %v368 = vpop.f32.mrb[0].mxu0
    %369 = vmatprep.mubr.f32.mxu0 0.0
    %370 = vmatmul.mubr.f32.gmra.mrb[0].mxu0 %v108
    %v371 = vpop.f32.mrb[0].mxu0
    %v372 = vadd.f32 %v299, %v371
    %v373 = vpop.f32.mrb[0].mxu0
    %374 = vdwg.mxu0
    %vm375 = vcmp.gt.f32.partialorder %v367, 0.0
    %vm376 = vcmp.gt.f32.partialorder %v372, 0.0
    %v377 = vmin.f32 %v367, 0.0
    %v378 = vmin.f32 %v372, 0.0
    %v379 = vmul.f32 %v377, 1.442695
    %v380 = vpow.pop %v379
    %v381 = vmul.f32 %v378, 1.442695
    %v382 = vpow.pop %v381
    %v383 = vsub.f32 %v380, 1.0
    %v384 = vsub.f32 %v382, 1.0
    %v385 = vsel %vm375, %v367, %v383
    %v386 = vsel %vm376, %v372, %v384
    %v387 = vlaneseq
    %v388 = vshrl.u32 %v387, 7
    %v389 = vsub.s32 0, %v388
    %v390 = vrot.slane %v93, %v389
    %391 = vmatprep.subr.mxu0 0.0
    %392 = vmatpush1.msra.mxu0 %v38
    %393 = vmatprep.subr.mxu0 0.0
    %394 = vmatpush1.msra.mxu0 %v39
    %395 = vmatprep.subr.mxu0 0.0
    %396 = vmatpush1.msra.mxu0 %v40
    %397 = vmatprep.subr.mxu0 0.0
    %398 = vmatpush1.msra.mxu0 %v41
    %399 = vmatprep.subr.mxu0 0.0
    %400 = vmatpush1.msra.mxu0 %v42
    %401 = vmatprep.subr.mxu0 0.0
    %402 = vmatpush1.msra.mxu0 %v43
    %403 = vmatprep.subr.mxu0 0.0
    %404 = vmatpush1.msra.mxu0 %v44
    %405 = vmatprep.subr.mxu0 0.0
    %406 = vmatpush1.msra.mxu0 %v45
    %407 = vmatprep.subr.mxu0 0.0
    %408 = vmatpush1.msra.mxu0 %v46
    %409 = vmatprep.subr.mxu0 0.0
    %410 = vmatpush1.msra.mxu0 %v47
    %411 = vmatprep.subr.mxu0 0.0
    %412 = vmatpush1.msra.mxu0 %v48
    %413 = vmatprep.subr.mxu0 0.0
    %414 = vmatpush1.msra.mxu0 %v49
    %415 = vmatprep.subr.mxu0 0.0
    %416 = vmatpush1.msra.mxu0 %v50
    %417 = vmatprep.subr.mxu0 0.0
    %418 = vmatpush1.msra.mxu0 %v51
    %419 = vmatprep.subr.mxu0 0.0
    %420 = vmatpush1.msra.mxu0 %v52
    %421 = vmatprep.subr.mxu0 0.0
    %422 = vmatpush1.msra.mxu0 %v53
    %423 = vmatprep.subr.mxu0 0.0
    %424 = vmatpush1.msra.mxu0 0.0
    %425 = vmatprep.subr.mxu0 0.0
    %426 = vmatpush1.msra.mxu0 0.0
    %427 = vmatprep.subr.mxu0 0.0
    %428 = vmatpush1.msra.mxu0 0.0
    %429 = vmatprep.subr.mxu0 0.0
    %430 = vmatpush1.msra.mxu0 0.0
    %431 = vmatprep.subr.mxu0 0.0
    %432 = vmatpush1.msra.mxu0 0.0
    %433 = vmatprep.subr.mxu0 0.0
    %434 = vmatpush1.msra.mxu0 0.0
    %435 = vmatprep.subr.mxu0 0.0
    %436 = vmatpush1.msra.mxu0 0.0
    %437 = vmatprep.subr.mxu0 0.0
    %438 = vmatpush1.msra.mxu0 0.0
    %439 = vmatprep.subr.mxu0 0.0
    %440 = vmatpush1.msra.mxu0 0.0
    %441 = vmatprep.subr.mxu0 0.0
    %442 = vmatpush1.msra.mxu0 0.0
    %443 = vmatprep.subr.mxu0 0.0
    %444 = vmatpush1.msra.mxu0 0.0
    %445 = vmatprep.subr.mxu0 0.0
    %446 = vmatpush1.msra.mxu0 0.0
    %447 = vmatprep.subr.mxu0 0.0
    %448 = vmatpush1.msra.mxu0 0.0
    %449 = vmatprep.subr.mxu0 0.0
    %450 = vmatpush1.msra.mxu0 0.0
    %451 = vmatprep.subr.mxu0 0.0
    %452 = vmatpush1.msra.mxu0 0.0
    %453 = vmatprep.subr.mxu0 0.0
    %454 = vmatpush1.msra.mxu0 0.0
    %455 = vmatprep.mubr.f32.mxu0 0.0
    %456 = vmatmul.mubr.f32.gmra.mrb[0].mxu0 %v385
    %v457 = vpop.f32.mrb[0].mxu0
    %v458 = vadd.f32 %v390, %v457
    %v459 = vpop.f32.mrb[0].mxu0
    %460 = vmatprep.mubr.f32.mxu0 0.0
    %461 = vmatmul.mubr.f32.gmra.mrb[0].mxu0 %v386
    %v462 = vpop.f32.mrb[0].mxu0
    %v463 = vadd.f32 %v390, %v462
    %v464 = vpop.f32.mrb[0].mxu0
    %465 = vdwg.mxu0
    %v466 = vlaneseq
    %v467 = vshrl.u32 %v466, 7
    %v468 = vsub.s32 0, %v467
    %v469 = vrot.slane %v94, %v468
    %v471 = vsel %vm103, %v458, 0
    %v474 = vsel %vm103, %v463, 0
    %476 = vmatprep.subr.mxu0 0.0
    %477 = vmatpush1.msra.mxu0 %v54
    %478 = vmatprep.subr.mxu0 0.0
    %479 = vmatpush1.msra.mxu0 %v55
    %480 = vmatprep.subr.mxu0 0.0
    %481 = vmatpush1.msra.mxu0 %v56
    %482 = vmatprep.subr.mxu0 0.0
    %483 = vmatpush1.msra.mxu0 %v57
    %484 = vmatprep.subr.mxu0 0.0
    %485 = vmatpush1.msra.mxu0 %v58
    %486 = vmatprep.subr.mxu0 0.0
    %487 = vmatpush1.msra.mxu0 %v59
    %488 = vmatprep.subr.mxu0 0.0
    %489 = vmatpush1.msra.mxu0 %v60
    %490 = vmatprep.subr.mxu0 0.0
    %491 = vmatpush1.msra.mxu0 %v61
    %492 = vmatprep.subr.mxu0 0.0
    %493 = vmatpush1.msra.mxu0 0.0
    %494 = vmatprep.subr.mxu0 0.0
    %495 = vmatpush1.msra.mxu0 0.0
    %496 = vmatprep.subr.mxu0 0.0
    %497 = vmatpush1.msra.mxu0 0.0
    %498 = vmatprep.subr.mxu0 0.0
    %499 = vmatpush1.msra.mxu0 0.0
    %500 = vmatprep.subr.mxu0 0.0
    %501 = vmatpush1.msra.mxu0 0.0
    %502 = vmatprep.subr.mxu0 0.0
    %503 = vmatpush1.msra.mxu0 0.0
    %504 = vmatprep.subr.mxu0 0.0
    %505 = vmatpush1.msra.mxu0 0.0
    %506 = vmatprep.subr.mxu0 0.0
    %507 = vmatpush1.msra.mxu0 0.0
    %508 = vmatprep.subr.mxu0 0.0
    %509 = vmatpush1.msra.mxu0 0.0
    %510 = vmatprep.subr.mxu0 0.0
    %511 = vmatpush1.msra.mxu0 0.0
    %512 = vmatprep.subr.mxu0 0.0
    %513 = vmatpush1.msra.mxu0 0.0
    %514 = vmatprep.subr.mxu0 0.0
    %515 = vmatpush1.msra.mxu0 0.0
    %516 = vmatprep.subr.mxu0 0.0
    %517 = vmatpush1.msra.mxu0 0.0
    %518 = vmatprep.subr.mxu0 0.0
    %519 = vmatpush1.msra.mxu0 0.0
    %520 = vmatprep.subr.mxu0 0.0
    %521 = vmatpush1.msra.mxu0 0.0
    %522 = vmatprep.subr.mxu0 0.0
    %523 = vmatpush1.msra.mxu0 0.0
    %524 = vmatprep.subr.mxu0 0.0
    %525 = vmatpush1.msra.mxu0 0.0
    %526 = vmatprep.subr.mxu0 0.0
    %527 = vmatpush1.msra.mxu0 0.0
    %528 = vmatprep.subr.mxu0 0.0
    %529 = vmatpush1.msra.mxu0 0.0
    %530 = vmatprep.subr.mxu0 0.0
    %531 = vmatpush1.msra.mxu0 0.0
    %532 = vmatprep.subr.mxu0 0.0
    %533 = vmatpush1.msra.mxu0 0.0
    %534 = vmatprep.subr.mxu0 0.0
    %535 = vmatpush1.msra.mxu0 0.0
    %536 = vmatprep.subr.mxu0 0.0
    %537 = vmatpush1.msra.mxu0 0.0
    %538 = vmatprep.subr.mxu0 0.0
    %539 = vmatpush1.msra.mxu0 0.0
    %540 = vmatprep.mubr.f32.mxu0 0.0
    %541 = vmatmul.mubr.f32.gmra.mrb[0].mxu0 %v471
    %v542 = vpop.f32.mrb[0].mxu0
    %v543 = vadd.f32 %v469, %v542
    %v544 = vpop.f32.mrb[0].mxu0
    %545 = vmatprep.mubr.f32.mxu0 0.0
    %546 = vmatmul.mubr.f32.gmra.mrb[0].mxu0 %v474
    %v547 = vpop.f32.mrb[0].mxu0
    %v548 = vadd.f32 %v469, %v547
    %v549 = vpop.f32.mrb[0].mxu0
    %550 = vdwg.mxu0
    %v551 = vxor.u32 %v543, 2147483648
    %v552 = vxor.u32 %v548, 2147483648
    %v553 = vmul.f32 %v551, 1.442695
    %v554 = vpow.pop %v553
    %v555 = vmul.f32 %v552, 1.442695
    %v556 = vpow.pop %v555
    %v557 = vadd.f32 %v554, 1.0
    %v558 = vadd.f32 %v556, 1.0
    %v559 = vrcp.pop %v557
    %v560 = vmul.f32 1.0, %v559
    %v561 = vrcp.pop %v558
    %v562 = vmul.f32 1.0, %v561
    %v563 = vmul.f32 %v560, %v458
    %v564 = vmul.f32 %v562, %v463
    %v565 = vadd.f32 %v563, %v28
    %v566 = vadd.f32 %v564, %v29
    %v568 = vsel %vm103, %v565, 0
    %v571 = vsel %vm103, %v566, 0
    %573 = vmatprep.subr.mxu0 0.0
    %574 = vmatpush1.msra.mxu0 %v74
    %575 = vmatprep.subr.mxu0 0.0
    %576 = vmatpush1.msra.mxu0 %v75
    %577 = vmatprep.subr.mxu0 0.0
    %578 = vmatpush1.msra.mxu0 %v76
    %579 = vmatprep.subr.mxu0 0.0
    %580 = vmatpush1.msra.mxu0 %v77
    %581 = vmatprep.subr.mxu0 0.0
    %582 = vmatpush1.msra.mxu0 %v78
    %583 = vmatprep.subr.mxu0 0.0
    %584 = vmatpush1.msra.mxu0 %v79
    %585 = vmatprep.subr.mxu0 0.0
    %586 = vmatpush1.msra.mxu0 %v80
    %587 = vmatprep.subr.mxu0 0.0
    %588 = vmatpush1.msra.mxu0 %v81
    %589 = vmatprep.subr.mxu0 0.0
    %590 = vmatpush1.msra.mxu0 0.0
    %591 = vmatprep.subr.mxu0 0.0
    %592 = vmatpush1.msra.mxu0 0.0
    %593 = vmatprep.subr.mxu0 0.0
    %594 = vmatpush1.msra.mxu0 0.0
    %595 = vmatprep.subr.mxu0 0.0
    %596 = vmatpush1.msra.mxu0 0.0
    %597 = vmatprep.subr.mxu0 0.0
    %598 = vmatpush1.msra.mxu0 0.0
    %599 = vmatprep.subr.mxu0 0.0
    %600 = vmatpush1.msra.mxu0 0.0
    %601 = vmatprep.subr.mxu0 0.0
    %602 = vmatpush1.msra.mxu0 0.0
    %603 = vmatprep.subr.mxu0 0.0
    %604 = vmatpush1.msra.mxu0 0.0
    %605 = vmatprep.subr.mxu0 0.0
    %606 = vmatpush1.msra.mxu0 0.0
    %607 = vmatprep.subr.mxu0 0.0
    %608 = vmatpush1.msra.mxu0 0.0
    %609 = vmatprep.subr.mxu0 0.0
    %610 = vmatpush1.msra.mxu0 0.0
    %611 = vmatprep.subr.mxu0 0.0
    %612 = vmatpush1.msra.mxu0 0.0
    %613 = vmatprep.subr.mxu0 0.0
    %614 = vmatpush1.msra.mxu0 0.0
    %615 = vmatprep.subr.mxu0 0.0
    %616 = vmatpush1.msra.mxu0 0.0
    %617 = vmatprep.subr.mxu0 0.0
    %618 = vmatpush1.msra.mxu0 0.0
    %619 = vmatprep.subr.mxu0 0.0
    %620 = vmatpush1.msra.mxu0 0.0
    %621 = vmatprep.subr.mxu0 0.0
    %622 = vmatpush1.msra.mxu0 0.0
    %623 = vmatprep.subr.mxu0 0.0
    %624 = vmatpush1.msra.mxu0 0.0
    %625 = vmatprep.subr.mxu0 0.0
    %626 = vmatpush1.msra.mxu0 0.0
    %627 = vmatprep.subr.mxu0 0.0
    %628 = vmatpush1.msra.mxu0 0.0
    %629 = vmatprep.subr.mxu0 0.0
    %630 = vmatpush1.msra.mxu0 0.0
    %631 = vmatprep.subr.mxu0 0.0
    %632 = vmatpush1.msra.mxu0 0.0
    %633 = vmatprep.subr.mxu0 0.0
    %634 = vmatpush1.msra.mxu0 0.0
    %635 = vmatprep.subr.mxu0 0.0
    %636 = vmatpush1.msra.mxu0 0.0
    %637 = vmatprep.mubr.f32.mxu0 0.0
    %638 = vmatmul.mubr.f32.gmra.mrb[0].mxu0 %v568
    %v639 = vpop.f32.mrb[0].mxu0
    %v640 = vadd.f32 0.0, %v639
    %v641 = vpop.f32.mrb[0].mxu0
    %642 = vmatprep.mubr.f32.mxu0 0.0
    %643 = vmatmul.mubr.f32.gmra.mrb[0].mxu0 %v571
    %v644 = vpop.f32.mrb[0].mxu0
    %v645 = vadd.f32 0.0, %v644
    %v646 = vpop.f32.mrb[0].mxu0
    %647 = vdwg.mxu0
    %v648 = vsub.f32 %v565, %v640
    %v649 = vsub.f32 %v566, %v645
    %v650 = vmul.f32 %v648, %v648
    %v651 = vmul.f32 %v649, %v649
    %v653 = vsel %vm103, %v650, 0
    %v656 = vsel %vm103, %v651, 0
    %658 = vmatprep.subr.mxu0 0.0
    %659 = vmatpush1.msra.mxu0 %v74
    %660 = vmatprep.subr.mxu0 0.0
    %661 = vmatpush1.msra.mxu0 %v75
    %662 = vmatprep.subr.mxu0 0.0
    %663 = vmatpush1.msra.mxu0 %v76
    %664 = vmatprep.subr.mxu0 0.0
    %665 = vmatpush1.msra.mxu0 %v77
    %666 = vmatprep.subr.mxu0 0.0
    %667 = vmatpush1.msra.mxu0 %v78
    %668 = vmatprep.subr.mxu0 0.0
    %669 = vmatpush1.msra.mxu0 %v79
    %670 = vmatprep.subr.mxu0 0.0
    %671 = vmatpush1.msra.mxu0 %v80
    %672 = vmatprep.subr.mxu0 0.0
    %673 = vmatpush1.msra.mxu0 %v81
    %674 = vmatprep.subr.mxu0 0.0
    %675 = vmatpush1.msra.mxu0 0.0
    %676 = vmatprep.subr.mxu0 0.0
    %677 = vmatpush1.msra.mxu0 0.0
    %678 = vmatprep.subr.mxu0 0.0
    %679 = vmatpush1.msra.mxu0 0.0
    %680 = vmatprep.subr.mxu0 0.0
    %681 = vmatpush1.msra.mxu0 0.0
    %682 = vmatprep.subr.mxu0 0.0
    %683 = vmatpush1.msra.mxu0 0.0
    %684 = vmatprep.subr.mxu0 0.0
    %685 = vmatpush1.msra.mxu0 0.0
    %686 = vmatprep.subr.mxu0 0.0
    %687 = vmatpush1.msra.mxu0 0.0
    %688 = vmatprep.subr.mxu0 0.0
    %689 = vmatpush1.msra.mxu0 0.0
    %690 = vmatprep.subr.mxu0 0.0
    %691 = vmatpush1.msra.mxu0 0.0
    %692 = vmatprep.subr.mxu0 0.0
    %693 = vmatpush1.msra.mxu0 0.0
    %694 = vmatprep.subr.mxu0 0.0
    %695 = vmatpush1.msra.mxu0 0.0
    %696 = vmatprep.subr.mxu0 0.0
    %697 = vmatpush1.msra.mxu0 0.0
    %698 = vmatprep.subr.mxu0 0.0
    %699 = vmatpush1.msra.mxu0 0.0
    %700 = vmatprep.subr.mxu0 0.0
    %701 = vmatpush1.msra.mxu0 0.0
    %702 = vmatprep.subr.mxu0 0.0
    %703 = vmatpush1.msra.mxu0 0.0
    %704 = vmatprep.subr.mxu0 0.0
    %705 = vmatpush1.msra.mxu0 0.0
    %706 = vmatprep.subr.mxu0 0.0
    %707 = vmatpush1.msra.mxu0 0.0
    %708 = vmatprep.subr.mxu0 0.0
    %709 = vmatpush1.msra.mxu0 0.0
    %710 = vmatprep.subr.mxu0 0.0
    %711 = vmatpush1.msra.mxu0 0.0
    %712 = vmatprep.subr.mxu0 0.0
    %713 = vmatpush1.msra.mxu0 0.0
    %714 = vmatprep.subr.mxu0 0.0
    %715 = vmatpush1.msra.mxu0 0.0
    %716 = vmatprep.subr.mxu0 0.0
    %717 = vmatpush1.msra.mxu0 0.0
    %718 = vmatprep.subr.mxu0 0.0
    %719 = vmatpush1.msra.mxu0 0.0
    %720 = vmatprep.subr.mxu0 0.0
    %721 = vmatpush1.msra.mxu0 0.0
    %722 = vmatprep.mubr.f32.mxu0 0.0
    %723 = vmatmul.mubr.f32.gmra.mrb[0].mxu0 %v653
    %v724 = vpop.f32.mrb[0].mxu0
    %v725 = vadd.f32 1e-05, %v724
    %v726 = vpop.f32.mrb[0].mxu0
    %727 = vmatprep.mubr.f32.mxu0 0.0
    %728 = vmatmul.mubr.f32.gmra.mrb[0].mxu0 %v656
    %v729 = vpop.f32.mrb[0].mxu0
    %v730 = vadd.f32 1e-05, %v729
    %v731 = vpop.f32.mrb[0].mxu0
    %732 = vdwg.mxu0
    %v733 = vrsqrt.pop %v725
    %v734 = vrsqrt.pop %v730
    %v735 = vmul.f32 %v648, %v733
    %v736 = vmul.f32 %v649, %v734
    %v737 = vlaneseq
    %v738 = vshrl.u32 %v737, 7
    %v739 = vsub.s32 0, %v738
    %v740 = vrot.slane %v95, %v739
    %v741 = vmul.f32 %v735, %v740
    %v742 = vmul.f32 %v736, %v740
    %v743 = vlaneseq
    %v744 = vshrl.u32 %v743, 7
    %v745 = vsub.s32 0, %v744
    %v746 = vrot.slane %v96, %v745
    %v747 = vadd.f32 %v741, %v746
    %v748 = vadd.f32 %v742, %v746
    %v750 = vsel %vm273, %v294, 0
    %v753 = vsel %vm273, %v295, 0
    %vm755 = vcmask 1043456
    %v757 = vsel %vm755, %v82, 0
    %759 = vmatprep.subr.mxu0 0.0
    %760 = vmatpush1.msra.mxu0 %v757
    %761 = vmatprep.subr.mxu0 0.0
    %762 = vmatpush1.msra.mxu0 0.0
    %763 = vmatprep.subr.mxu0 0.0
    %764 = vmatpush1.msra.mxu0 0.0
    %765 = vmatprep.subr.mxu0 0.0
    %766 = vmatpush1.msra.mxu0 0.0
    %767 = vmatprep.subr.mxu0 0.0
    %768 = vmatpush1.msra.mxu0 0.0
    %769 = vmatprep.subr.mxu0 0.0
    %770 = vmatpush1.msra.mxu0 0.0
    %771 = vmatprep.subr.mxu0 0.0
    %772 = vmatpush1.msra.mxu0 0.0
    %773 = vmatprep.subr.mxu0 0.0
    %774 = vmatpush1.msra.mxu0 0.0
    %775 = vmatprep.subr.mxu0 0.0
    %776 = vmatpush1.msra.mxu0 0.0
    %777 = vmatprep.subr.mxu0 0.0
    %778 = vmatpush1.msra.mxu0 0.0
    %779 = vmatprep.subr.mxu0 0.0
    %780 = vmatpush1.msra.mxu0 0.0
    %781 = vmatprep.subr.mxu0 0.0
    %782 = vmatpush1.msra.mxu0 0.0
    %783 = vmatprep.subr.mxu0 0.0
    %784 = vmatpush1.msra.mxu0 0.0
    %785 = vmatprep.subr.mxu0 0.0
    %786 = vmatpush1.msra.mxu0 0.0
    %787 = vmatprep.subr.mxu0 0.0
    %788 = vmatpush1.msra.mxu0 0.0
    %789 = vmatprep.subr.mxu0 0.0
    %790 = vmatpush1.msra.mxu0 0.0
    %791 = vmatprep.subr.mxu0 0.0
    %792 = vmatpush1.msra.mxu0 0.0
    %793 = vmatprep.subr.mxu0 0.0
    %794 = vmatpush1.msra.mxu0 0.0
    %795 = vmatprep.subr.mxu0 0.0
    %796 = vmatpush1.msra.mxu0 0.0
    %797 = vmatprep.subr.mxu0 0.0
    %798 = vmatpush1.msra.mxu0 0.0
    %799 = vmatprep.subr.mxu0 0.0
    %800 = vmatpush1.msra.mxu0 0.0
    %801 = vmatprep.subr.mxu0 0.0
    %802 = vmatpush1.msra.mxu0 0.0
    %803 = vmatprep.subr.mxu0 0.0
    %804 = vmatpush1.msra.mxu0 0.0
    %805 = vmatprep.subr.mxu0 0.0
    %806 = vmatpush1.msra.mxu0 0.0
    %807 = vmatprep.subr.mxu0 0.0
    %808 = vmatpush1.msra.mxu0 0.0
    %809 = vmatprep.subr.mxu0 0.0
    %810 = vmatpush1.msra.mxu0 0.0
    %811 = vmatprep.subr.mxu0 0.0
    %812 = vmatpush1.msra.mxu0 0.0
    %813 = vmatprep.subr.mxu0 0.0
    %814 = vmatpush1.msra.mxu0 0.0
    %815 = vmatprep.subr.mxu0 0.0
    %816 = vmatpush1.msra.mxu0 0.0
    %817 = vmatprep.subr.mxu0 0.0
    %818 = vmatpush1.msra.mxu0 0.0
    %819 = vmatprep.subr.mxu0 0.0
    %820 = vmatpush1.msra.mxu0 0.0
    %821 = vmatprep.subr.mxu0 0.0
    %822 = vmatpush1.msra.mxu0 0.0
    %823 = vmatprep.mubr.f32.mxu0 0.0
    %824 = vmatmul.mubr.f32.gmra.mrb[0].mxu0 %v750
    %v825 = vpop.f32.mrb[0].mxu0
    %v826 = vadd.f32 0.0, %v825
    %v827 = vpop.f32.mrb[0].mxu0
    %828 = vmatprep.mubr.f32.mxu0 0.0
    %829 = vmatmul.mubr.f32.gmra.mrb[0].mxu0 %v753
    %v830 = vpop.f32.mrb[0].mxu0
    %v831 = vadd.f32 0.0, %v830
    %v832 = vpop.f32.mrb[0].mxu0
    %833 = vdwg.mxu0
    %v834 = vmul.f32 %v826, %v747
    %v835 = vmul.f32 %v831, %v748
    %v837 = vsel %vm755, %v91, 0
    %839 = vmatprep.subr.mxu0 0.0
    %840 = vmatpush1.msra.mxu0 %v837
    %841 = vmatprep.subr.mxu0 0.0
    %842 = vmatpush1.msra.mxu0 0.0
    %843 = vmatprep.subr.mxu0 0.0
    %844 = vmatpush1.msra.mxu0 0.0
    %845 = vmatprep.subr.mxu0 0.0
    %846 = vmatpush1.msra.mxu0 0.0
    %847 = vmatprep.subr.mxu0 0.0
    %848 = vmatpush1.msra.mxu0 0.0
    %849 = vmatprep.subr.mxu0 0.0
    %850 = vmatpush1.msra.mxu0 0.0
    %851 = vmatprep.subr.mxu0 0.0
    %852 = vmatpush1.msra.mxu0 0.0
    %853 = vmatprep.subr.mxu0 0.0
    %854 = vmatpush1.msra.mxu0 0.0
    %855 = vmatprep.subr.mxu0 0.0
    %856 = vmatpush1.msra.mxu0 0.0
    %857 = vmatprep.subr.mxu0 0.0
    %858 = vmatpush1.msra.mxu0 0.0
    %859 = vmatprep.subr.mxu0 0.0
    %860 = vmatpush1.msra.mxu0 0.0
    %861 = vmatprep.subr.mxu0 0.0
    %862 = vmatpush1.msra.mxu0 0.0
    %863 = vmatprep.subr.mxu0 0.0
    %864 = vmatpush1.msra.mxu0 0.0
    %865 = vmatprep.subr.mxu0 0.0
    %866 = vmatpush1.msra.mxu0 0.0
    %867 = vmatprep.subr.mxu0 0.0
    %868 = vmatpush1.msra.mxu0 0.0
    %869 = vmatprep.subr.mxu0 0.0
    %870 = vmatpush1.msra.mxu0 0.0
    %871 = vmatprep.subr.mxu0 0.0
    %872 = vmatpush1.msra.mxu0 0.0
    %873 = vmatprep.subr.mxu0 0.0
    %874 = vmatpush1.msra.mxu0 0.0
    %875 = vmatprep.subr.mxu0 0.0
    %876 = vmatpush1.msra.mxu0 0.0
    %877 = vmatprep.subr.mxu0 0.0
    %878 = vmatpush1.msra.mxu0 0.0
    %879 = vmatprep.subr.mxu0 0.0
    %880 = vmatpush1.msra.mxu0 0.0
    %881 = vmatprep.subr.mxu0 0.0
    %882 = vmatpush1.msra.mxu0 0.0
    %883 = vmatprep.subr.mxu0 0.0
    %884 = vmatpush1.msra.mxu0 0.0
    %885 = vmatprep.subr.mxu0 0.0
    %886 = vmatpush1.msra.mxu0 0.0
    %887 = vmatprep.subr.mxu0 0.0
    %888 = vmatpush1.msra.mxu0 0.0
    %889 = vmatprep.subr.mxu0 0.0
    %890 = vmatpush1.msra.mxu0 0.0
    %891 = vmatprep.subr.mxu0 0.0
    %892 = vmatpush1.msra.mxu0 0.0
    %893 = vmatprep.subr.mxu0 0.0
    %894 = vmatpush1.msra.mxu0 0.0
    %895 = vmatprep.subr.mxu0 0.0
    %896 = vmatpush1.msra.mxu0 0.0
    %897 = vmatprep.subr.mxu0 0.0
    %898 = vmatpush1.msra.mxu0 0.0
    %899 = vmatprep.subr.mxu0 0.0
    %900 = vmatpush1.msra.mxu0 0.0
    %901 = vmatprep.subr.mxu0 0.0
    %902 = vmatpush1.msra.mxu0 0.0
    %903 = vmatprep.mubr.f32.mxu0 0.0
    %904 = vmatmul.mubr.f32.gmra.mrb[0].mxu0 %v750
    %v905 = vpop.f32.mrb[0].mxu0
    %v906 = vadd.f32 0.0, %v905
    %v907 = vpop.f32.mrb[0].mxu0
    %908 = vmatprep.mubr.f32.mxu0 0.0
    %909 = vmatmul.mubr.f32.gmra.mrb[0].mxu0 %v753
    %v910 = vpop.f32.mrb[0].mxu0
    %v911 = vadd.f32 0.0, %v910
    %v912 = vpop.f32.mrb[0].mxu0
    %913 = vdwg.mxu0
    %v915 = vsel %vm103, %v834, 0
    %v918 = vsel %vm103, %v835, 0
    %920 = vmatprep.subr.mxu0 0.0
    %921 = vmatpush1.msra.mxu0 %v83
    %922 = vmatprep.subr.mxu0 0.0
    %923 = vmatpush1.msra.mxu0 %v84
    %924 = vmatprep.subr.mxu0 0.0
    %925 = vmatpush1.msra.mxu0 %v85
    %926 = vmatprep.subr.mxu0 0.0
    %927 = vmatpush1.msra.mxu0 %v86
    %928 = vmatprep.subr.mxu0 0.0
    %929 = vmatpush1.msra.mxu0 %v87
    %930 = vmatprep.subr.mxu0 0.0
    %931 = vmatpush1.msra.mxu0 %v88
    %932 = vmatprep.subr.mxu0 0.0
    %933 = vmatpush1.msra.mxu0 %v89
    %934 = vmatprep.subr.mxu0 0.0
    %935 = vmatpush1.msra.mxu0 %v90
    %936 = vmatprep.subr.mxu0 0.0
    %937 = vmatpush1.msra.mxu0 0.0
    %938 = vmatprep.subr.mxu0 0.0
    %939 = vmatpush1.msra.mxu0 0.0
    %940 = vmatprep.subr.mxu0 0.0
    %941 = vmatpush1.msra.mxu0 0.0
    %942 = vmatprep.subr.mxu0 0.0
    %943 = vmatpush1.msra.mxu0 0.0
    %944 = vmatprep.subr.mxu0 0.0
    %945 = vmatpush1.msra.mxu0 0.0
    %946 = vmatprep.subr.mxu0 0.0
    %947 = vmatpush1.msra.mxu0 0.0
    %948 = vmatprep.subr.mxu0 0.0
    %949 = vmatpush1.msra.mxu0 0.0
    %950 = vmatprep.subr.mxu0 0.0
    %951 = vmatpush1.msra.mxu0 0.0
    %952 = vmatprep.subr.mxu0 0.0
    %953 = vmatpush1.msra.mxu0 0.0
    %954 = vmatprep.subr.mxu0 0.0
    %955 = vmatpush1.msra.mxu0 0.0
    %956 = vmatprep.subr.mxu0 0.0
    %957 = vmatpush1.msra.mxu0 0.0
    %958 = vmatprep.subr.mxu0 0.0
    %959 = vmatpush1.msra.mxu0 0.0
    %960 = vmatprep.subr.mxu0 0.0
    %961 = vmatpush1.msra.mxu0 0.0
    %962 = vmatprep.subr.mxu0 0.0
    %963 = vmatpush1.msra.mxu0 0.0
    %964 = vmatprep.subr.mxu0 0.0
    %965 = vmatpush1.msra.mxu0 0.0
    %966 = vmatprep.subr.mxu0 0.0
    %967 = vmatpush1.msra.mxu0 0.0
    %968 = vmatprep.subr.mxu0 0.0
    %969 = vmatpush1.msra.mxu0 0.0
    %970 = vmatprep.subr.mxu0 0.0
    %971 = vmatpush1.msra.mxu0 0.0
    %972 = vmatprep.subr.mxu0 0.0
    %973 = vmatpush1.msra.mxu0 0.0
    %974 = vmatprep.subr.mxu0 0.0
    %975 = vmatpush1.msra.mxu0 0.0
    %976 = vmatprep.subr.mxu0 0.0
    %977 = vmatpush1.msra.mxu0 0.0
    %978 = vmatprep.subr.mxu0 0.0
    %979 = vmatpush1.msra.mxu0 0.0
    %980 = vmatprep.subr.mxu0 0.0
    %981 = vmatpush1.msra.mxu0 0.0
    %982 = vmatprep.subr.mxu0 0.0
    %983 = vmatpush1.msra.mxu0 0.0
    %984 = vmatprep.mubr.f32.mxu0 0.0
    %985 = vmatmul.mubr.f32.gmra.mrb[0].mxu0 %v915
    %v986 = vpop.f32.mrb[0].mxu0
    %v987 = vadd.f32 %v906, %v986
    %v988 = vpop.f32.mrb[0].mxu0
    %989 = vmatprep.mubr.f32.mxu0 0.0
    %990 = vmatmul.mubr.f32.gmra.mrb[0].mxu0 %v918
    %v991 = vpop.f32.mrb[0].mxu0
    %v992 = vadd.f32 %v911, %v991
    %v993 = vpop.f32.mrb[0].mxu0
    %994 = vdwg.mxu0
    %995 = vst [vmem:[%s3] sm:$0xff] %v987
    %996 = vst [vmem:[%s3 + $0x8] sm:$0xff] %v992
    // Predicated region
    $region18: #{vsn_forward.1} parent=1 // pred_check
      _
    $region19: #{vsn_forward.1} parent=1 // pred_check_branch
      %998 = sbr.rel (0) target = $region21
    $region20: #{vsn_forward.1} parent=1 // pred_region
      _
    $region21: #{vsn_forward.1} parent=1 // pred_fallthru
      _
    // Predicated region
    $region22: #{vsn_forward.1} parent=1 // pred_check
      _
    $region23: #{vsn_forward.1} parent=1 // pred_check_branch
      %1000 = sbr.rel (0) target = $region25
    $region24: #{vsn_forward.1} parent=1 // pred_region
      _
    $region25: #{vsn_forward.1} parent=1 // pred_fallthru
      _
    %1001 = vsyncpa [#allocation3], 1

</llo_original>
